<compile_context>
chip_gen: v6e
topology: v6e:2x2x1
jax: 0.10.0
libtpu: 0.0.40
codegen_flags: <defaults>
</compile_context>

<pallas_src>
import jax
import jax.numpy as jnp
from jax.experimental import pallas as pl
from jax.experimental.pallas import tpu as pltpu

_SMOOTH = 1e-6


def _choose_tile_rows(h: int, row_bytes: int, target_bytes: int) -> int:
    """Largest divisor of h that is a multiple of 8 (or == h) within budget."""
    cap = max(1, target_bytes // max(row_bytes, 1))
    best = 0
    for th in range(1, h + 1):
        if h % th != 0 or th > cap:
            continue
        if th % 8 == 0 or th == h:
            best = th
    if best == 0:  # no 8-multiple divisor fits; fall back to any divisor <= cap
        for th in range(1, h + 1):
            if h % th == 0 and th <= cap:
                best = th
    return max(best, 1)


def _make_mixed_loss_kernel(gamma: float, tile_h: int, width: int):
    g = float(gamma)

    def kernel(x_ref, t_ref, part_ref):
        # part_ref: (3, 8, W) resident accumulator for this batch element:
        #   row 0: sum(focal elementwise)
        #   row 1: sum(sigmoid(x) * t)        (dice intersection)
        #   row 2: sum(sigmoid(x) + t)        (dice denominator)
        j = pl.program_id(1)

        @pl.when(j == 0)
        def _init():
            part_ref[...] = jnp.zeros_like(part_ref)

        x = x_ref[...].astype(jnp.float32)          # (tile_h, W)
        t = t_ref[...].astype(jnp.float32)

        # --- shared transcendentals: 1 exp + 1 log1p + 1 divide / element ---
        e = jnp.exp(-jnp.abs(x))                    # exp(-|x|)
        log_term = jnp.log1p(e)                     # log(1 + exp(-|x|))
        r = 1.0 / (1.0 + e)

        xt = x * t
        bce = jnp.maximum(x, 0.0) - xt + log_term   # stable BCE-with-logits
        z = x - 2.0 * xt                            # = -x * (2t - 1)

        # Focal weight = sigmoid(z)**gamma.  For binary targets |z| == |x|, so
        # sigmoid(z) is recovered from e/r with no extra transcendental.
        # TODO(synk): soft (non-binary) targets need the general
        # exp(gamma * logsigmoid(z)) path with its own exp(-|z|).
        if g == round(g) and 1.0 <= g <= 4.0:
            w = jnp.where(z >= 0.0, r, e * r)       # sigmoid(z)
            fw = w
            for _ in range(int(round(g)) - 1):
                fw = fw * w
        else:
            fw = jnp.exp(g * (jnp.minimum(z, 0.0) - log_term))

        p = jnp.where(x >= 0.0, r, e * r)           # sigmoid(x)

        focal_el = fw * bce
        inter_el = p * t
        denom_el = p + t

        # Per-step partials without cross-lane reductions: fold the row tile
        # onto 8 sublanes with pure VPU adds; the single cross-lane reduce
        # happens once in the wrapper epilogue.
        if tile_h % 8 == 0:
            def _fold(v):
                return v.reshape(tile_h // 8, 8, width).sum(axis=0)
            part_ref[0, :, :] = part_ref[0, :, :] + _fold(focal_el)
            part_ref[1, :, :] = part_ref[1, :, :] + _fold(inter_el)
            part_ref[2, :, :] = part_ref[2, :, :] + _fold(denom_el)
        else:
            part_ref[0, 0:1, :] = part_ref[0, 0:1, :] + jnp.sum(
                focal_el, axis=0, keepdims=True)
            part_ref[1, 0:1, :] = part_ref[1, 0:1, :] + jnp.sum(
                inter_el, axis=0, keepdims=True)
            part_ref[2, 0:1, :] = part_ref[2, 0:1, :] + jnp.sum(
                denom_el, axis=0, keepdims=True)

    return kernel


def mixed_loss(inputs, target, alpha: float = 10.0, gamma: float = 2.0):
    """JAX/Pallas equivalent of MixedLoss.forward.

    inputs: tuple/list whose first element is an NCHW array (N, C, H, W)
    target: (N, H, W) array (binary mask)
    Returns: dict(loss=<scalar f32>)
    """
    x = inputs[0] if isinstance(inputs, (tuple, list)) else inputs
    n, c, h, w = x.shape
    assert c >= 2, "channel 1 must exist"
    assert target.shape == (n, h, w)

    # Budget tile_h against the full double-buffered per-step footprint:
    # (f32 logits row + native-dtype target row) x 2 pipeline buffers.
    tgt_bytes = jnp.dtype(target.dtype).itemsize
    row_bytes = 2 * w * (4 + tgt_bytes)             # both inputs, double-buffered
    tile_h = _choose_tile_rows(h, row_bytes=row_bytes,
                               target_bytes=12 * 1024 * 1024)
    grid = (n, h // tile_h)

    kernel = _make_mixed_loss_kernel(float(gamma), tile_h, w)

    parts = pl.pallas_call(
        kernel,
        out_shape=jax.ShapeDtypeStruct((n, 3, 8, w), jnp.float32),
        grid_spec=pltpu.PrefetchScalarGridSpec(
            num_scalar_prefetch=0,
            grid=grid,
            in_specs=[
                # NCHW logits: channel 1 selected via index_map, N/C squeezed.
                pl.BlockSpec((None, None, tile_h, w), lambda i, j: (i, 1, j, 0)),
                # target at its native dtype, N squeezed.
                pl.BlockSpec((None, tile_h, w), lambda i, j: (i, j, 0)),
            ],
            out_specs=pl.BlockSpec((None, 3, 8, w), lambda i, j: (i, 0, 0, 0)),
        ),
        compiler_params=pltpu.CompilerParams(
            dimension_semantics=("parallel", "arbitrary"),
            vmem_limit_bytes=32 * 1024 * 1024),
    )(x, target)

    # Tiny epilogue: single cross-lane reduce + scalar combine.
    sums = jnp.sum(parts, axis=(0, 2, 3))                 # (3,)
    focal_mean = sums[0] / float(n * h * w)
    dice = (2.0 * sums[1] + _SMOOTH) / (sums[2] + _SMOOTH)
    loss = alpha * focal_mean - jnp.log(dice)
    return dict(loss=loss)


def _reference_mixed_loss(inputs, target, alpha=10.0, gamma=2.0):
    """Pure-JAX reference mirroring the PyTorch code, for sanity checking."""
    x = inputs[0][:, 1, :, :].astype(jnp.float32)
    t = target.astype(jnp.float32)
    max_val = jnp.maximum(-x, 0.0)
    loss = x - x * t + max_val + jnp.log(jnp.exp(-max_val) + jnp.exp(-x - max_val))
    invprobs = jax.nn.log_sigmoid(-x * (t * 2.0 - 1.0))
    focal = jnp.mean(jnp.exp(invprobs * gamma) * loss)
    sig = jax.nn.sigmoid(x).reshape(-1)
    tf = t.reshape(-1)
    smooth = 1e-6
    dice = (2.0 * jnp.sum(sig * tf) + smooth) / (jnp.sum(sig) + jnp.sum(tf) + smooth)
    return alpha * focal - jnp.log(dice)


if __name__ == "__main__":
    key = jax.random.PRNGKey(0)
    k1, k2 = jax.random.split(key)

    N, C, H, W = 2, 4, 16, 16
    logits = jax.random.normal(k1, (N, C, H, W), dtype=jnp.float32)
    target = (jax.random.uniform(k2, (N, H, W)) > 0.5).astype(jnp.float32)

    out = mixed_loss((logits,), target, alpha=10.0, gamma=2.0)
    loss = jax.block_until_ready(out["loss"])

    ref = _reference_mixed_loss((logits,), target, alpha=10.0, gamma=2.0)
    assert jnp.allclose(loss, ref, rtol=1e-4, atol=1e-4), (loss, ref)

    print("KERNEL_OK")
</pallas_src>

<mosaic_0001>
module attributes {stable_mosaic.version = 11 : i64} {
  func.func @kernel(%arg0: i32, %arg1: i32, %arg2: memref<1x1x16x16xf32, #tpu.memory_space<vmem>>, %arg3: memref<1x16x16xf32, #tpu.memory_space<vmem>>, %arg4: memref<1x3x8x16xf32, #tpu.memory_space<vmem>>) attributes {dimension_semantics = [#tpu.dimension_semantics<parallel>, #tpu.dimension_semantics<arbitrary>], iteration_bounds = array<i64: 2, 1>, scalar_prefetch = 0 : i64, scratch_operands = 0 : i64, tpu.core_type = #tpu.core_type<tc>, window_params = [{transform_indices = @transform_0, window_bounds = array<i64: 1, 1, 16, 16>}, {transform_indices = @transform_1, window_bounds = array<i64: 1, 16, 16>}, {transform_indices = @transform_2, window_bounds = array<i64: 1, 3, 8, 16>}]} {
    %c0_i32 = arith.constant 0 : i32
    %0 = arith.cmpi eq, %arg1, %c0_i32 : i32
    %1 = arith.extui %0 : i1 to i32
    %c0_i32_0 = arith.constant 0 : i32
    %2 = arith.cmpi ne, %1, %c0_i32_0 : i32
    scf.if %2 {
      %cst_38 = arith.constant 0.000000e+00 : f32
      %60 = vector.broadcast %cst_38 : f32 to vector<3x8x16xf32>
      %c0_39 = arith.constant 0 : index
      %c0_40 = arith.constant 0 : index
      %c0_41 = arith.constant 0 : index
      %c0_42 = arith.constant 0 : index
      %61 = vector.load %arg4[%c0_39, %c0_40, %c0_41, %c0_42] : memref<1x3x8x16xf32, #tpu.memory_space<vmem>>, vector<1x3x8x16xf32>
      %62 = vector.shape_cast %61 : vector<1x3x8x16xf32> to vector<3x8x16xf32>
      %63 = vector.shape_cast %60 : vector<3x8x16xf32> to vector<1x3x8x16xf32>
      tpu.vector_store %arg4[%c0_39, %c0_40, %c0_41, %c0_42], %63 {strides = array<i32>} : memref<1x3x8x16xf32, #tpu.memory_space<vmem>>, vector<1x3x8x16xf32>,
    } else {
    }
    %c0 = arith.constant 0 : index
    %c0_1 = arith.constant 0 : index
    %c0_2 = arith.constant 0 : index
    %c0_3 = arith.constant 0 : index
    %3 = vector.load %arg2[%c0, %c0_1, %c0_2, %c0_3] : memref<1x1x16x16xf32, #tpu.memory_space<vmem>>, vector<1x1x16x16xf32>
    %4 = vector.shape_cast %3 : vector<1x1x16x16xf32> to vector<16x16xf32>
    %c0_4 = arith.constant 0 : index
    %c0_5 = arith.constant 0 : index
    %c0_6 = arith.constant 0 : index
    %5 = vector.load %arg3[%c0_4, %c0_5, %c0_6] : memref<1x16x16xf32, #tpu.memory_space<vmem>>, vector<1x16x16xf32>
    %6 = vector.shape_cast %5 : vector<1x16x16xf32> to vector<16x16xf32>
    %7 = math.absf %4 : vector<16x16xf32>
    %cst = arith.constant 0.000000e+00 : f32
    %8 = vector.broadcast %cst : f32 to vector<16x16xf32>
    %9 = arith.subf %8, %7 : vector<16x16xf32>
    %10 = math.exp %9 : vector<16x16xf32>
    %11 = math.log1p %10 : vector<16x16xf32>
    %cst_7 = arith.constant 1.000000e+00 : f32
    %12 = vector.broadcast %cst_7 : f32 to vector<16x16xf32>
    %13 = arith.addf %12, %10 : vector<16x16xf32>
    %cst_8 = arith.constant 1.000000e+00 : f32
    %14 = vector.broadcast %cst_8 : f32 to vector<16x16xf32>
    %15 = arith.divf %14, %13 : vector<16x16xf32>
    %16 = arith.mulf %4, %6 : vector<16x16xf32>
    %cst_9 = arith.constant 0.000000e+00 : f32
    %17 = vector.broadcast %cst_9 : f32 to vector<16x16xf32>
    %18 = arith.maximumf %4, %17 : vector<16x16xf32>
    %19 = arith.subf %18, %16 : vector<16x16xf32>
    %20 = arith.addf %19, %11 : vector<16x16xf32>
    %cst_10 = arith.constant 2.000000e+00 : f32
    %21 = vector.broadcast %cst_10 : f32 to vector<16x16xf32>
    %22 = arith.mulf %21, %16 : vector<16x16xf32>
    %23 = arith.subf %4, %22 : vector<16x16xf32>
    %cst_11 = arith.constant 0.000000e+00 : f32
    %24 = vector.broadcast %cst_11 : f32 to vector<16x16xf32>
    %25 = arith.cmpf oge, %23, %24 : vector<16x16xf32>
    %26 = arith.mulf %10, %15 : vector<16x16xf32>
    %27 = arith.select %25, %15, %26 : vector<16x16xi1>, vector<16x16xf32>
    %28 = arith.mulf %27, %27 : vector<16x16xf32>
    %cst_12 = arith.constant 0.000000e+00 : f32
    %29 = vector.broadcast %cst_12 : f32 to vector<16x16xf32>
    %30 = arith.cmpf oge, %4, %29 : vector<16x16xf32>
    %31 = arith.mulf %10, %15 : vector<16x16xf32>
    %32 = arith.select %30, %15, %31 : vector<16x16xi1>, vector<16x16xf32>
    %33 = arith.mulf %28, %20 : vector<16x16xf32>
    %34 = arith.mulf %32, %6 : vector<16x16xf32>
    %35 = arith.addf %32, %6 : vector<16x16xf32>
    %c0_13 = arith.constant 0 : index
    %c0_14 = arith.constant 0 : index
    %c0_15 = arith.constant 0 : index
    %c0_16 = arith.constant 0 : index
    %36 = vector.load %arg4[%c0_13, %c0_14, %c0_15, %c0_16] : memref<1x3x8x16xf32, #tpu.memory_space<vmem>>, vector<1x1x8x16xf32>
    %37 = vector.shape_cast %36 : vector<1x1x8x16xf32> to vector<8x16xf32>
    %38 = vector.shape_cast %33 : vector<16x16xf32> to vector<2x8x16xf32>
    %cst_17 = arith.constant dense<0.000000e+00> : vector<8x16xf32>
    %39 = vector.multi_reduction <add>, %38, %cst_17 [0] : vector<2x8x16xf32> to vector<8x16xf32>
    %40 = arith.addf %37, %39 : vector<8x16xf32>
    %c0_18 = arith.constant 0 : index
    %c0_19 = arith.constant 0 : index
    %c0_20 = arith.constant 0 : index
    %c0_21 = arith.constant 0 : index
    %41 = vector.load %arg4[%c0_18, %c0_19, %c0_20, %c0_21] : memref<1x3x8x16xf32, #tpu.memory_space<vmem>>, vector<1x1x8x16xf32>
    %42 = vector.shape_cast %41 : vector<1x1x8x16xf32> to vector<8x16xf32>
    %43 = vector.shape_cast %40 : vector<8x16xf32> to vector<1x1x8x16xf32>
    tpu.vector_store %arg4[%c0_18, %c0_19, %c0_20, %c0_21], %43 {strides = array<i32>} : memref<1x3x8x16xf32, #tpu.memory_space<vmem>>, vector<1x1x8x16xf32>,
    %c0_22 = arith.constant 0 : index
    %c1 = arith.constant 1 : index
    %c0_23 = arith.constant 0 : index
    %c0_24 = arith.constant 0 : index
    %44 = vector.load %arg4[%c0_22, %c1, %c0_23, %c0_24] : memref<1x3x8x16xf32, #tpu.memory_space<vmem>>, vector<1x1x8x16xf32>
    %45 = vector.shape_cast %44 : vector<1x1x8x16xf32> to vector<8x16xf32>
    %46 = vector.shape_cast %34 : vector<16x16xf32> to vector<2x8x16xf32>
    %cst_25 = arith.constant dense<0.000000e+00> : vector<8x16xf32>
    %47 = vector.multi_reduction <add>, %46, %cst_25 [0] : vector<2x8x16xf32> to vector<8x16xf32>
    %48 = arith.addf %45, %47 : vector<8x16xf32>
    %c0_26 = arith.constant 0 : index
    %c1_27 = arith.constant 1 : index
    %c0_28 = arith.constant 0 : index
    %c0_29 = arith.constant 0 : index
    %49 = vector.load %arg4[%c0_26, %c1_27, %c0_28, %c0_29] : memref<1x3x8x16xf32, #tpu.memory_space<vmem>>, vector<1x1x8x16xf32>
    %50 = vector.shape_cast %49 : vector<1x1x8x16xf32> to vector<8x16xf32>
    %51 = vector.shape_cast %48 : vector<8x16xf32> to vector<1x1x8x16xf32>
    tpu.vector_store %arg4[%c0_26, %c1_27, %c0_28, %c0_29], %51 {strides = array<i32>} : memref<1x3x8x16xf32, #tpu.memory_space<vmem>>, vector<1x1x8x16xf32>,
    %c0_30 = arith.constant 0 : index
    %c2 = arith.constant 2 : index
    %c0_31 = arith.constant 0 : index
    %c0_32 = arith.constant 0 : index
    %52 = vector.load %arg4[%c0_30, %c2, %c0_31, %c0_32] : memref<1x3x8x16xf32, #tpu.memory_space<vmem>>, vector<1x1x8x16xf32>
    %53 = vector.shape_cast %52 : vector<1x1x8x16xf32> to vector<8x16xf32>
    %54 = vector.shape_cast %35 : vector<16x16xf32> to vector<2x8x16xf32>
    %cst_33 = arith.constant dense<0.000000e+00> : vector<8x16xf32>
    %55 = vector.multi_reduction <add>, %54, %cst_33 [0] : vector<2x8x16xf32> to vector<8x16xf32>
    %56 = arith.addf %53, %55 : vector<8x16xf32>
    %c0_34 = arith.constant 0 : index
    %c2_35 = arith.constant 2 : index
    %c0_36 = arith.constant 0 : index
    %c0_37 = arith.constant 0 : index
    %57 = vector.load %arg4[%c0_34, %c2_35, %c0_36, %c0_37] : memref<1x3x8x16xf32, #tpu.memory_space<vmem>>, vector<1x1x8x16xf32>
    %58 = vector.shape_cast %57 : vector<1x1x8x16xf32> to vector<8x16xf32>
    %59 = vector.shape_cast %56 : vector<8x16xf32> to vector<1x1x8x16xf32>
    tpu.vector_store %arg4[%c0_34, %c2_35, %c0_36, %c0_37], %59 {strides = array<i32>} : memref<1x3x8x16xf32, #tpu.memory_space<vmem>>, vector<1x1x8x16xf32>,
    return
  }
  func.func @transform_0(%arg0: i32, %arg1: i32) -> (i32, i32, i32, i32) {
    %c1_i32 = arith.constant 1 : i32
    %c0_i32 = arith.constant 0 : i32
    %c0_i32_0 = arith.constant 0 : i32
    return %arg0, %c1_i32, %arg1, %c0_i32 : i32, i32, i32, i32
  }
  func.func @transform_1(%arg0: i32, %arg1: i32) -> (i32, i32, i32) {
    %c0_i32 = arith.constant 0 : i32
    %c0_i32_0 = arith.constant 0 : i32
    return %arg0, %arg1, %c0_i32 : i32, i32, i32
  }
  func.func @transform_2(%arg0: i32, %arg1: i32) -> (i32, i32, i32, i32) {
    %c0_i32 = arith.constant 0 : i32
    %c0_i32_0 = arith.constant 0 : i32
    %c0_i32_1 = arith.constant 0 : i32
    %c0_i32_2 = arith.constant 0 : i32
    return %arg0, %c0_i32, %c0_i32_0, %c0_i32_1 : i32, i32, i32, i32
  }
}

</mosaic_0001>

<llo_original>
// kernel: tpu_custom_call.1
$region0: #{tpu_custom_call.1}
  #allocation0 [shape = 'u32[]', space=smem, size = 0x4, offset = 0x4, fixed_abs, tag = 'smem constant byte address 0x4 - core index']
  #allocation1 [shape = 'u32[144,128]{1,0:T(1,128)}', space=vmem, size = 0x12000, scoped, tag = 'internal scratch']
  %s0 = inlined_call_operand.hbm [shape: f32[2,4,16,16], index: 0, kind: input, shape index: {}]
  %s1 = inlined_call_operand.hbm [shape: f32[2,16,16], index: 1, kind: input, shape index: {}]
  %s2 = inlined_call_operand.hbm [shape: f32[2,3,8,16], index: 2, kind: output, shape index: {}]
  %s3 = sld [smem:[#allocation0]]
  $region53: #{tpu_custom_call.1} parent=0
    _
  %s5 = ssub.s32 1, %s3
  %s6 = scalar_select 0, %s5, %s3
  $region1: #{tpu_custom_call.1} parent=0
    #allocation2 [shape = 'u8[16384]{0}', space=vmem, size = 0x4000, scoped, tag = 'input window, operand 0']
    #allocation3 [shape = 's32[2]{0}', space=sflag, size = 0x8, scoped, tag = 'scoped memory for tpu_custom_call.1']
    #allocation4 [shape = 's32[2]{0}', space=sflag, size = 0x8, scoped, tag = 'scoped memory for tpu_custom_call.1']
    #allocation5 [shape = 'u8[16384]{0}', space=vmem, size = 0x4000, scoped, tag = 'input window, operand 1']
    #allocation6 [shape = 's32[2]{0}', space=sflag, size = 0x8, scoped, tag = 'scoped memory for tpu_custom_call.1']
    #allocation7 [shape = 'u8[24576]{0}', space=vmem, size = 0x6000, scoped, tag = 'output window, operand 0']
    %7 = vsyncpa [#allocation3], 0
    %s8 = scalar_lea.sflag [#allocation3], 1
    %9 = vsyncpa %s8, 0
    %10 = vsyncpa [#allocation6], 0
    %s11 = scalar_lea.sflag [#allocation6], 1
    %12 = vsyncpa %s11, 0
    %13 = vsyncpa [#allocation4], 0
    %s14 = scalar_lea.sflag [#allocation4], 1
    %15 = vsyncpa %s14, 0
    loop: start=0, step=1, limit=4
    $region2: #{tpu_custom_call.1} parent=1 // loop_pre_header
      _
    $region3: #{tpu_custom_call.1} parent=1 // loop_header
      %s17 = sphi 0, %s21
      %p18 = scmp.ge.s32.totalorder %s17, 4
      %s24 = sphi 0, %s36
      %s25 = sphi 0, %s32
      %s26 = sphi 0, %s24
      %s27 = sphi 0, %s25
      %s28 = sphi 0, %s26
      %s29 = sphi 0, %s27
      %s41 = sphi 0, %s43
      %s44 = sphi 0, %s41
      %s45 = sphi 0, %s44
      %s61 = sphi 0, %s45
      %s69 = sphi 0, %s71
      %s72 = sphi 0, %s69
      %s73 = sphi 0, %s72
      %s89 = sphi 0, %s73
      %s95 = sphi 0, %s97
      %s98 = sphi 0, %s95
      %s99 = sphi 0, %s98
      %s115 = sphi 0, %s99
    $region4: #{tpu_custom_call.1} parent=1 // loop_header_branch
      %20 = sbr.rel (%p18) target = $region8
    $region5: #{tpu_custom_call.1} parent=1 // loop_body
      %s22 = ssub.s32 %s17, 1
      %s23 = ssub.s32 %s17, 2
      %s30 = sadd.s32 1, %s25
      %p31 = scmp.ge.s32.totalorder %s30, 1
      %s32 = scalar_select %p31, 0, %s30
      %s33 = sadd.s32 1, %s24
      %s34 = scalar_select %p31, %s33, %s24
      %p35 = scmp.ge.s32.totalorder %s34, 2
      %s36 = scalar_select %p35, 0, %s34
      %s37 = ssub.s32 %s24, %s36
      %s38 = ssub.s32 %s25, %s32
      %s39 = sor.u32 %s37, %s38
      %p40 = scmp.eq.s32.totalorder %s39, 0
      %s42 = sadd.s32 %s41, 1
      %s43 = scalar_select %p40, %s41, %s42
      %p46 = pneg %p40
      %p47 = scmp.eq.s32.totalorder %s17, 1
      %p48 = por %p46, %p47
      %p49 = scmp.ne.s32.totalorder %s41, %s44
      %p50 = scmp.eq.s32.totalorder %s17, 0
      %p51 = por %p49, %p50
      %p52 = scmp.ne.s32.totalorder %s41, %s44
      %p53 = scmp.eq.s32.totalorder %s22, 1
      %p54 = por %p52, %p53
      %p55 = scmp.ne.s32.totalorder %s44, %s45
      %p56 = scmp.eq.s32.totalorder %s22, 0
      %p57 = por %p55, %p56
      %p58 = scmp.ne.s32.totalorder %s44, %s45
      %p59 = scmp.eq.s32.totalorder %s23, 1
      %p60 = por %p58, %p59
      %p62 = scmp.ne.s32.totalorder %s45, %s61
      %p63 = scmp.eq.s32.totalorder %s23, 0
      %p64 = por %p62, %p63
      %s65 = ssub.s32 %s24, %s36
      %s66 = ssub.s32 %s25, %s32
      %s67 = sor.u32 %s65, %s66
      %p68 = scmp.eq.s32.totalorder %s67, 0
      %s70 = sadd.s32 %s69, 1
      %s71 = scalar_select %p68, %s69, %s70
      %p74 = pneg %p68
      %p75 = scmp.eq.s32.totalorder %s17, 1
      %p76 = por %p74, %p75
      %p77 = scmp.ne.s32.totalorder %s69, %s72
      %p78 = scmp.eq.s32.totalorder %s17, 0
      %p79 = por %p77, %p78
      %p80 = scmp.ne.s32.totalorder %s69, %s72
      %p81 = scmp.eq.s32.totalorder %s22, 1
      %p82 = por %p80, %p81
      %p83 = scmp.ne.s32.totalorder %s72, %s73
      %p84 = scmp.eq.s32.totalorder %s22, 0
      %p85 = por %p83, %p84
      %p86 = scmp.ne.s32.totalorder %s72, %s73
      %p87 = scmp.eq.s32.totalorder %s23, 1
      %p88 = por %p86, %p87
      %p90 = scmp.ne.s32.totalorder %s73, %s89
      %p91 = scmp.eq.s32.totalorder %s23, 0
      %p92 = por %p90, %p91
      %s93 = ssub.s32 %s24, %s36
      %p94 = scmp.eq.s32.totalorder %s93, 0
      %s96 = sadd.s32 %s95, 1
      %s97 = scalar_select %p94, %s95, %s96
      %p100 = pneg %p94
      %p101 = scmp.eq.s32.totalorder %s17, 1
      %p102 = por %p100, %p101
      %p103 = scmp.ne.s32.totalorder %s95, %s98
      %p104 = scmp.eq.s32.totalorder %s17, 0
      %p105 = por %p103, %p104
      %p106 = scmp.ne.s32.totalorder %s95, %s98
      %p107 = scmp.eq.s32.totalorder %s22, 1
      %p108 = por %p106, %p107
      %p109 = scmp.ne.s32.totalorder %s98, %s99
      %p110 = scmp.eq.s32.totalorder %s22, 0
      %p111 = por %p109, %p110
      %p112 = scmp.ne.s32.totalorder %s98, %s99
      %p113 = scmp.eq.s32.totalorder %s23, 1
      %p114 = por %p112, %p113
      %p116 = scmp.ne.s32.totalorder %s99, %s115
      %p117 = scmp.eq.s32.totalorder %s23, 0
      %p118 = por %p116, %p117
      %p119 = scmp.le.s32.totalorder 1, %s17
      %p120 = scmp.lt.s32.totalorder %s17, 3
      %p121 = pnand %p119, %p120
      %p122 = pneg %p121
      // Predicated region
      $region9: #{tpu_custom_call.1} parent=5 // pred_check
        _
      $region10: #{tpu_custom_call.1} parent=5 // pred_check_branch
        %124 = sbr.rel (%p121) target = $region12
      $region11: #{tpu_custom_call.1} parent=5 // pred_region
        %s125 = ssub.s32 %s17, 1
      $region12: #{tpu_custom_call.1} parent=5 // pred_fallthru
        _
      %p126 = scmp.lt.s32.totalorder %s17, 2
      // Predicated region
      $region13: #{tpu_custom_call.1} parent=5 // pred_check
        %p127 = pneg %p126
      $region14: #{tpu_custom_call.1} parent=5 // pred_check_branch
        %129 = sbr.rel (%p127) target = $region16
      $region15: #{tpu_custom_call.1} parent=5 // pred_region
        // Predicated region
        $region17: #{tpu_custom_call.1} parent=15 // pred_check
          %p130 = pneg %p51
        $region18: #{tpu_custom_call.1} parent=15 // pred_check_branch
          %132 = sbr.rel (%p130) target = $region20
        $region19: #{tpu_custom_call.1} parent=15 // pred_region
          %s133 = sand.u32 %s41, 1
          %s134 = scalar_lea.sflag [#allocation3], %s133
          %s135 = sand.u32 %s41, 1
          %s136 = smul.addr %s135, 16
          %s137 = scalar_lea.vmem [#allocation2], %s136
          %s138 = smul.u32 2, %s25
          %s140 = ssub.s32 256, 256
          %141 = vsyncadd %s134, %s140
          %s142 = sadd.s32 %s138, 2
          %s143 = smul.addr %s24, 8
          %s144 = sadd.s32 %s142, %s143
          %s145 = smul.addr %s144, 128
          %s146 = scalar_lea.hbm %s0, %s145
          %s147 = sshll.u32 %s137, 4
          %s148 = int_to_ptr.vmem [resolvable:$true] %s147
          %153 = dma.hbm_to_vmem [thread:$0]  %s146, 256, %s148, %s134, 128, 128, 8
        $region20: #{tpu_custom_call.1} parent=15 // pred_fallthru
          _
        // Predicated region
        $region21: #{tpu_custom_call.1} parent=15 // pred_check
          %p154 = pneg %p79
        $region22: #{tpu_custom_call.1} parent=15 // pred_check_branch
          %156 = sbr.rel (%p154) target = $region24
        $region23: #{tpu_custom_call.1} parent=15 // pred_region
          %s157 = sand.u32 %s69, 1
          %s158 = scalar_lea.sflag [#allocation6], %s157
          %s159 = sand.u32 %s69, 1
          %s160 = smul.addr %s159, 16
          %s161 = scalar_lea.vmem [#allocation5], %s160
          %s162 = smul.u32 2, %s25
          %s164 = ssub.s32 256, 256
          %165 = vsyncadd %s158, %s164
          %s166 = smul.addr %s24, 2
          %s167 = sadd.s32 %s162, %s166
          %s168 = smul.addr %s167, 128
          %s169 = scalar_lea.hbm %s1, %s168
          %s170 = sshll.u32 %s161, 4
          %s171 = int_to_ptr.vmem [resolvable:$true] %s170
          %176 = dma.hbm_to_vmem [thread:$0]  %s169, 256, %s171, %s158, 128, 128, 8
        $region24: #{tpu_custom_call.1} parent=15 // pred_fallthru
          _
      $region16: #{tpu_custom_call.1} parent=5 // pred_fallthru
        _
      %p177 = scmp.le.s32.totalorder 1, %s17
      %p178 = scmp.lt.s32.totalorder %s17, 3
      %p179 = pnand %p177, %p178
      %p180 = pneg %p179
      // Predicated region
      $region25: #{tpu_custom_call.1} parent=5 // pred_check
        _
      $region26: #{tpu_custom_call.1} parent=5 // pred_check_branch
        %182 = sbr.rel (%p179) target = $region28
      $region27: #{tpu_custom_call.1} parent=5 // pred_region
        %s183 = ssub.s32 %s17, 1
        %s184 = sand.u32 %s44, 1
        %s185 = scalar_lea.sflag [#allocation3], %s184
        %s186 = sand.u32 %s44, 1
        %s187 = smul.addr %s186, 16
        %s188 = scalar_lea.vmem [#allocation2], %s187
        // Predicated region
        $region29: #{tpu_custom_call.1} parent=27 // pred_check
          %p189 = pneg %p57
        $region30: #{tpu_custom_call.1} parent=27 // pred_check_branch
          %191 = sbr.rel (%p189) target = $region32
        $region31: #{tpu_custom_call.1} parent=27 // pred_region
          %192 = dma.done %s185, 256
        $region32: #{tpu_custom_call.1} parent=27 // pred_fallthru
          _
        %s193 = sand.u32 %s72, 1
        %s194 = scalar_lea.sflag [#allocation6], %s193
        %s195 = sand.u32 %s72, 1
        %s196 = smul.addr %s195, 16
        %s197 = scalar_lea.vmem [#allocation5], %s196
        // Predicated region
        $region33: #{tpu_custom_call.1} parent=27 // pred_check
          %p198 = pneg %p85
        $region34: #{tpu_custom_call.1} parent=27 // pred_check_branch
          %200 = sbr.rel (%p198) target = $region36
        $region35: #{tpu_custom_call.1} parent=27 // pred_region
          %201 = dma.done %s194, 256
        $region36: #{tpu_custom_call.1} parent=27 // pred_fallthru
          _
        %s202 = sand.u32 %s44, 1
        %s203 = scalar_lea.sflag [#allocation3], %s202
        %s204 = sand.u32 %s44, 1
        %s205 = smul.addr %s204, 16
        %s206 = scalar_lea.vmem [#allocation2], %s205
        %p207 = pneg %p57
        %p208 = pneg %p54
        %s209 = sand.u32 %s72, 1
        %s210 = scalar_lea.sflag [#allocation6], %s209
        %s211 = sand.u32 %s72, 1
        %s212 = smul.addr %s211, 16
        %s213 = scalar_lea.vmem [#allocation5], %s212
        %p214 = pneg %p85
        %p215 = pneg %p82
        %p216 = pneg %p111
        %p217 = pneg %p108
        %s218 = sand.u32 %s98, 1
        %s219 = scalar_lea.sflag [#allocation4], %s218
        %s220 = sand.u32 %s98, 1
        %s221 = smul.addr %s220, 24
        %s222 = scalar_lea.vmem [#allocation7], %s221
        %s223 = smul.u32 2, %s27
        %s224 = smul.u32 2, %s27
        %p225 = scmp.eq.s32.totalorder %s27, 0
        // Predicated region
        $region37: #{tpu_custom_call.1} parent=27 // pred_check
          %p226 = pneg %p225
        $region38: #{tpu_custom_call.1} parent=27 // pred_check_branch
          %228 = sbr.rel (%p226) target = $region40
        $region39: #{tpu_custom_call.1} parent=27 // pred_region
          %vm229 = vcmask 130048
          %230 = vst.msk [vmem:[%s222] sm:$0xff] %vm229, 0.0
          %231 = vst.msk [vmem:[%s222 + $0x8] sm:$0xff] %vm229, 0.0
          %232 = vst.msk [vmem:[%s222 + $0x10] sm:$0xff] %vm229, 0.0
        $region40: #{tpu_custom_call.1} parent=27 // pred_fallthru
          _
        %v233 = vld [vmem:[%s188] sm:$0xff]
        %v234 = vld [vmem:[%s188 + $0x8] sm:$0xff]
        %v235 = vld [vmem:[%s197] sm:$0xff]
        %v236 = vld [vmem:[%s197 + $0x8] sm:$0xff]
        %v237 = vand.u32 2147483647, %v233
        %v238 = vand.u32 2147483647, %v234
        %v239 = vsub.f32 0.0, %v237
        %v240 = vsub.f32 0.0, %v238
        %v241 = vmul.f32 %v239, 1.442695
        %v242 = vpow.pop %v241
        %v243 = vmul.f32 %v240, 1.442695
        %v244 = vpow.pop %v243
        %v245 = vadd.f32 %v242, 1.0
        %v246 = vlog2.pop %v245
        %v247 = vmul.f32 %v246, 0.6931472
        %v248 = vmul.f32 -0.5, %v242
        %v249 = vadd.f32 %v248, 1.0
        %v250 = vmul.f32 %v249, %v242
        %v251 = vand.u32 2147483647, %v242
        %vm252 = vcmp.lt.f32.partialorder %v251, 0.0004427343
        %v253 = vsel %vm252, %v250, %v247
        %v254 = vadd.f32 %v244, 1.0
        %v255 = vlog2.pop %v254
        %v256 = vmul.f32 %v255, 0.6931472
        %v257 = vmul.f32 -0.5, %v244
        %v258 = vadd.f32 %v257, 1.0
        %v259 = vmul.f32 %v258, %v244
        %v260 = vand.u32 2147483647, %v244
        %vm261 = vcmp.lt.f32.partialorder %v260, 0.0004427343
        %v262 = vsel %vm261, %v259, %v256
        %v263 = vadd.f32 %v242, 1.0
        %v264 = vadd.f32 %v244, 1.0
        %v265 = vrcp.pop %v263
        %v266 = vmul.f32 1.0, %v265
        %v267 = vrcp.pop %v264
        %v268 = vmul.f32 1.0, %v267
        %v269 = vmul.f32 %v233, %v235
        %v270 = vmul.f32 %v234, %v236
        %v271 = vmax.f32 %v233, 0.0
        %v272 = vmax.f32 %v234, 0.0
        %v273 = vsub.f32 %v271, %v269
        %v274 = vsub.f32 %v272, %v270
        %v275 = vadd.f32 %v273, %v253
        %v276 = vadd.f32 %v274, %v262
        %v277 = vmul.f32 %v269, 2.0
        %v278 = vmul.f32 %v270, 2.0
        %v279 = vsub.f32 %v233, %v277
        %v280 = vsub.f32 %v234, %v278
        %vm281 = vcmp.ge.f32.partialorder %v279, 0.0
        %vm282 = vcmp.ge.f32.partialorder %v280, 0.0
        %v283 = vmul.f32 %v242, %v266
        %v284 = vmul.f32 %v244, %v268
        %v285 = vsel %vm281, %v266, %v283
        %v286 = vsel %vm282, %v268, %v284
        %v287 = vmul.f32 %v285, %v285
        %v288 = vmul.f32 %v286, %v286
        %vm289 = vcmp.ge.f32.partialorder %v233, 0.0
        %vm290 = vcmp.ge.f32.partialorder %v234, 0.0
        %v291 = vsel %vm289, %v266, %v283
        %v292 = vsel %vm290, %v268, %v284
        %v293 = vmul.f32 %v287, %v275
        %v294 = vmul.f32 %v288, %v276
        %v295 = vmul.f32 %v291, %v235
        %v296 = vmul.f32 %v292, %v236
        %v297 = vadd.f32 %v291, %v235
        %v298 = vadd.f32 %v292, %v236
        %v299 = vld [vmem:[%s222] sm:$0xff]
        %vm300 = vcmask 130048
        %v301 = vsel %vm300, %v293, 0.0
        %v302 = vsel %vm300, %v294, 0.0
        %v303 = vadd.f32 %v301, %v302
        %v304 = vadd.f32 %v299, %v303
        %305 = vst.msk [vmem:[%s222] sm:$0xff] %vm300, %v304
        %s306 = scalar_lea.vmem %s222, 8 [#allocation7]
        %v307 = vld [vmem:[%s306] sm:$0xff]
        %v308 = vsel %vm300, %v295, 0.0
        %v309 = vsel %vm300, %v296, 0.0
        %v310 = vadd.f32 %v308, %v309
        %v311 = vadd.f32 %v307, %v310
        %312 = vst.msk [vmem:[%s306] sm:$0xff] %vm300, %v311
        %s313 = scalar_lea.vmem %s222, 16 [#allocation7]
        %v314 = vld [vmem:[%s313] sm:$0xff]
        %v315 = vsel %vm300, %v297, 0.0
        %v316 = vsel %vm300, %v298, 0.0
        %v317 = vadd.f32 %v315, %v316
        %v318 = vadd.f32 %v314, %v317
        %319 = vst.msk [vmem:[%s313] sm:$0xff] %vm300, %v318
        %s320 = sand.u32 %s98, 1
        %s321 = scalar_lea.sflag [#allocation4], %s320
        %s322 = sand.u32 %s98, 1
        %s323 = smul.addr %s322, 24
        %s324 = scalar_lea.vmem [#allocation7], %s323
        // Predicated region
        $region41: #{tpu_custom_call.1} parent=27 // pred_check
          %p325 = pneg %p108
        $region42: #{tpu_custom_call.1} parent=27 // pred_check_branch
          %327 = sbr.rel (%p325) target = $region44
        $region43: #{tpu_custom_call.1} parent=27 // pred_region
          %s329 = ssub.s32 384, 384
          %330 = vsyncadd %s321, %s329
          %s331 = smul.addr %s26, 3
          %s332 = smul.addr %s331, 128
          %s333 = scalar_lea.hbm %s2, %s332
          %s334 = sshll.u32 %s324, 4
          %s335 = int_to_ptr.vmem [resolvable:$true] %s334
          %340 = dma.vmem_to_hbm [thread:$0]  %s335, 384, %s333, %s321, 128, 128, 8
        $region44: #{tpu_custom_call.1} parent=27 // pred_fallthru
          _
      $region28: #{tpu_custom_call.1} parent=5 // pred_fallthru
        _
      %p341 = scmp.le.s32.totalorder 2, %s17
      // Predicated region
      $region45: #{tpu_custom_call.1} parent=5 // pred_check
        %p342 = pneg %p341
      $region46: #{tpu_custom_call.1} parent=5 // pred_check_branch
        %344 = sbr.rel (%p342) target = $region48
      $region47: #{tpu_custom_call.1} parent=5 // pred_region
        %s345 = ssub.s32 %s17, 2
        // Predicated region
        $region49: #{tpu_custom_call.1} parent=47 // pred_check
          %p346 = pneg %p114
        $region50: #{tpu_custom_call.1} parent=47 // pred_check_branch
          %348 = sbr.rel (%p346) target = $region52
        $region51: #{tpu_custom_call.1} parent=47 // pred_region
          %s349 = sand.u32 %s99, 1
          %s350 = scalar_lea.sflag [#allocation4], %s349
          %s351 = sand.u32 %s99, 1
          %s352 = smul.addr %s351, 24
          %s353 = scalar_lea.vmem [#allocation7], %s352
          %354 = dma.done %s350, 384
        $region52: #{tpu_custom_call.1} parent=47 // pred_fallthru
          _
      $region48: #{tpu_custom_call.1} parent=5 // pred_fallthru
        _
    $region6: #{tpu_custom_call.1} parent=1 // loop_footer
      %s21 = sadd.s32 1, %s17
    $region7: #{tpu_custom_call.1} parent=1 // loop_footer_branch
      %16 = sbr.rel target = $region3
    $region8: #{tpu_custom_call.1} parent=1 // loop_exit
      _
    %355 = vsyncpa [#allocation3], 1
    %s356 = scalar_lea.sflag [#allocation3], 1
    %357 = vsyncpa %s356, 1
    %358 = vsyncpa [#allocation6], 1
    %s359 = scalar_lea.sflag [#allocation6], 1
    %360 = vsyncpa %s359, 1
    %361 = vsyncpa [#allocation4], 1
    %s362 = scalar_lea.sflag [#allocation4], 1
    %363 = vsyncpa %s362, 1

</llo_original>
